<compile_context>
chip_gen: v5e
topology: v5e:2x2
jax: 0.10.0
libtpu: 0.0.40
codegen_flags: <defaults>
</compile_context>

<pallas_src>
import functools

import jax
import jax.numpy as jnp
import numpy as np
from jax.experimental import pallas as pl
from jax.experimental.pallas import tpu as pltpu


def _round_up(x, m):
    return ((x + m - 1) // m) * m


# ------------------------------- fused critic kernel ------------------------------- #
def critic_kernel(x_ref, cw1_ref, cb1_ref, cw2_ref, cb2_ref,
                  ut_ref, lw1_ref, lb1_ref, lw2_ref, lb2_ref,
                  base_ref, fact_ref, acc_ref, *, inv_pixels, tp):
    """Grid = (B, num_pixel_tiles); channels on sublanes, pixels on lanes (NCHW).

    x_ref   : (C, TP)      f32  pixel tile of one batch element
    cw1_ref : (C, C)       f32  conv1 weight, (out, in) layout (resident)
    cb1_ref : (C, 1)       f32  conv1 bias column
    cw2_ref : (C, 1)       f32  conv2 weight column
    cb2_ref : (1, 1)       f32  conv2 bias (SMEM scalar)
    ut_ref  : (Kp, 128)    f32  unit slices of this batch element, K padded to 8,
                                U padded to 128 lanes
    lw1_ref : (C, Kp)      f32  linear1 weight, (out, in), zero-padded along K
    lb1_ref : (C, 1)       f32
    lw2_ref : (C, 1)       f32
    lb2_ref : (1, 1)       f32  SMEM scalar
    base_ref: (1, 1, 128)  f32  lane-padded baseline scalar for this batch element
    fact_ref: (1, 1, 128)  f32  lane-padded factorized row for this batch element
    acc_ref : (C, 128)     f32  lane-dense running spatial partial sums
    """
    p = pl.program_id(1)

    @pl.when(p == 0)
    def _init():
        acc_ref[...] = jnp.zeros_like(acc_ref)

    # 1x1 conv == per-pixel matmul (f32 operands, f32 accumulation).
    h = jnp.dot(cw1_ref[...], x_ref[...], preferred_element_type=jnp.float32)   # (C, TP)
    h = jnp.maximum(h + cb1_ref[...], 0.0)                                      # bias + ReLU

    # Lane-dense partial accumulation: no per-step cross-lane reduce, no masked stores.
    if tp % 128 == 0:
        for j in range(tp // 128):                       # static, unrolled lane chunks
            acc_ref[...] += h[:, j * 128:(j + 1) * 128]
    else:                                                # irregular-tile fallback
        acc_ref[:, :1] += jnp.sum(h, axis=1, keepdims=True)

    @pl.when(p == pl.num_programs(1) - 1)
    def _finalize():
        # Mean folding: pool first, then the d->1 projection (they commute).
        pooled = jnp.sum(acc_ref[...], axis=1, keepdims=True) * inv_pixels      # (C, 1)
        val = jnp.sum(pooled * cw2_ref[...], axis=0, keepdims=True) + cb2_ref[0, 0]
        base_ref[...] = jnp.broadcast_to(val[None], base_ref.shape)             # 128-lane store

        # Fused factorized (units) head for this batch element — runs once per b.
        hu = jnp.dot(lw1_ref[...], ut_ref[...], preferred_element_type=jnp.float32)  # (C, 128)
        hu = jnp.maximum(hu + lb1_ref[...], 0.0)
        fv = jnp.sum(hu * lw2_ref[...], axis=0, keepdims=True) + lb2_ref[0, 0]       # (1, 128)
        fact_ref[...] = fv[None]                                                      # 128-lane store


# ----------------------------------- JAX glue ----------------------------------- #
def get_unit_slices(x_nchw, unit_indices, unit_energies):
    """x_nchw (B,C,H,W), unit_indices (B,U,2) int32, unit_energies (B,U) -> (B,U,C+1)."""
    B = x_nchw.shape[0]
    b_idx = jnp.arange(B)[:, None]
    feats = x_nchw[b_idx, :, unit_indices[..., 0], unit_indices[..., 1]]   # (B, U, C)
    return jnp.concatenate([feats, unit_energies[..., None]], axis=-1)


def _pick_pixel_tile(num_pixels, channels, vmem_budget_bytes=8 << 20):
    """Prefer the full pixel extent (one grid step per batch element); otherwise the
    largest 128-aligned tile that divides the pixel count."""
    if 2 * channels * num_pixels * 4 <= vmem_budget_bytes:   # double-buffered f32 block
        return num_pixels
    for t in (16384, 8192, 4096, 2048, 1024, 512, 256, 128):
        if t <= num_pixels and num_pixels % t == 0:
            return t
    return num_pixels


def prepare_params(params, d_model):
    """Parameter-init-time layout work (transpose / pad / reshape), NOT per-call."""
    cw1, cb1, cw2, cb2, lw1, lb1, lw2, lb2 = params
    K = d_model + 1
    Kp = _round_up(K, 8)
    cw1t = jnp.transpose(cw1)                                    # (out, in) = (C, C)
    cb1c = cb1.reshape(d_model, 1)
    cw2c = cw2.reshape(d_model, 1)
    cb2s = cb2.reshape(1, 1)
    lw1t = jnp.transpose(jnp.pad(lw1, ((0, Kp - K), (0, 0))))    # (C, Kp), K zero-padded
    lb1c = lb1.reshape(d_model, 1)
    lw2c = lw2.reshape(d_model, 1)
    lb2s = lb2.reshape(1, 1)
    return (cw1t, cb1c, cw2c, cb2s, lw1t, lb1c, lw2c, lb2s)


def critic_head_forward(x_nchw, unit_indices, unit_energies, prep):
    cw1t, cb1c, cw2c, cb2s, lw1t, lb1c, lw2c, lb2s = prep
    B, C, H, W = x_nchw.shape
    U = unit_indices.shape[1]
    P = H * W
    TP = _pick_pixel_tile(P, C)
    K = C + 1
    Kp = lw1t.shape[1]
    UL = 128                                                   # lane-padded unit count

    xr = x_nchw.reshape(B, C, P)                               # free reshape, stays NCHW

    # Unit-slice gather (data-dependent -> XLA), then pad K->Kp (sublanes), U->128 (lanes).
    u = get_unit_slices(x_nchw, unit_indices, unit_energies)   # (B, U, K)
    ut = jnp.transpose(u, (0, 2, 1))                           # (B, K, U)
    ut = jnp.pad(ut, ((0, 0), (0, Kp - K), (0, UL - U)))       # (B, Kp, 128)

    flops = 2 * B * P * C * C + 4 * B * P * C + 2 * B * UL * C * Kp + 4 * B * UL * C
    bytes_accessed = 4 * (xr.size + ut.size + cw1t.size + lw1t.size
                          + 4 * C + 2 + 2 * B * 128)

    base_out, fact_out = pl.pallas_call(
        functools.partial(critic_kernel, inv_pixels=1.0 / float(P), tp=TP),
        out_shape=(jax.ShapeDtypeStruct((B, 1, 128), jnp.float32),
                   jax.ShapeDtypeStruct((B, 1, 128), jnp.float32)),
        grid_spec=pltpu.PrefetchScalarGridSpec(
            num_scalar_prefetch=0,
            grid=(B, P // TP),
            in_specs=[
                pl.BlockSpec((None, C, TP), lambda b, p: (b, 0, p)),
                pl.BlockSpec((C, C), lambda b, p: (0, 0)),          # resident weights
                pl.BlockSpec((C, 1), lambda b, p: (0, 0)),
                pl.BlockSpec((C, 1), lambda b, p: (0, 0)),
                pl.BlockSpec((1, 1), lambda b, p: (0, 0),
                             memory_space=pltpu.MemorySpace.SMEM),
                pl.BlockSpec((None, Kp, 128), lambda b, p: (b, 0, 0)),
                pl.BlockSpec((C, Kp), lambda b, p: (0, 0)),
                pl.BlockSpec((C, 1), lambda b, p: (0, 0)),
                pl.BlockSpec((C, 1), lambda b, p: (0, 0)),
                pl.BlockSpec((1, 1), lambda b, p: (0, 0),
                             memory_space=pltpu.MemorySpace.SMEM),
            ],
            out_specs=(
                pl.BlockSpec((1, 1, 128), lambda b, p: (b, 0, 0)),
                pl.BlockSpec((1, 1, 128), lambda b, p: (b, 0, 0)),
            ),
            scratch_shapes=[pltpu.VMEM((C, 128), jnp.float32)],
        ),
        compiler_params=pltpu.CompilerParams(
            dimension_semantics=("parallel", "arbitrary"),
        ),
        cost_estimate=pl.CostEstimate(flops=int(flops), transcendentals=0,
                                      bytes_accessed=int(bytes_accessed)),
    )(xr, cw1t, cb1c, cw2c, cb2s, ut, lw1t, lb1c, lw2c, lb2s)

    baseline_value = base_out[:, 0, 0]          # (B,)
    factorized_value = fact_out[:, 0, :U]       # (B, U)
    # postprocess_value: identity (abstract in the base class)
    return baseline_value, factorized_value


# ------------------------------ pure-JAX reference ------------------------------ #
def reference_forward(x_nchw, unit_indices, unit_energies, params):
    cw1, cb1, cw2, cb2, lw1, lb1, lw2, lb2 = params
    B, C, H, W = x_nchw.shape
    xf = jnp.transpose(x_nchw, (0, 2, 3, 1)).reshape(B, H * W, C)
    h = jnp.maximum(xf @ cw1 + cb1, 0.0)
    v = h @ cw2 + cb2                                               # (B, P, 1)
    base = jnp.mean(v[..., 0], axis=-1)                             # (B,)
    u = get_unit_slices(x_nchw, unit_indices, unit_energies)
    hu = jnp.maximum(u @ lw1 + lb1, 0.0)
    fv = hu @ lw2 + lb2                                             # (B, U, 1)
    return base, fv[..., 0]


# --------------------------------------- main --------------------------------------- #
if __name__ == "__main__":
    B, D_MODEL, H, W, U = 2, 32, 16, 16, 8

    key = jax.random.PRNGKey(0)
    ks = jax.random.split(key, 12)

    # Module __init__ parameter shapes (expressed as matmul operands):
    #   Conv2d(d,d,1) -> (d,d) ; Conv2d(d,1,1) -> (d,1)
    #   Linear(d+1,d) -> (d+1,d) ; Linear(d,1) -> (d,1)
    cw1 = 0.1 * jax.random.normal(ks[0], (D_MODEL, D_MODEL), jnp.float32)
    cb1 = 0.1 * jax.random.normal(ks[1], (1, D_MODEL), jnp.float32)
    cw2 = 0.1 * jax.random.normal(ks[2], (D_MODEL, 1), jnp.float32)
    cb2 = 0.1 * jax.random.normal(ks[3], (1, 1), jnp.float32)
    lw1 = 0.1 * jax.random.normal(ks[4], (D_MODEL + 1, D_MODEL), jnp.float32)
    lb1 = 0.1 * jax.random.normal(ks[5], (1, D_MODEL), jnp.float32)
    lw2 = 0.1 * jax.random.normal(ks[6], (D_MODEL, 1), jnp.float32)
    lb2 = 0.1 * jax.random.normal(ks[7], (1, 1), jnp.float32)
    params = (cw1, cb1, cw2, cb2, lw1, lb1, lw2, lb2)

    x = jax.random.normal(ks[8], (B, D_MODEL, H, W), jnp.float32)            # NCHW
    unit_rows = jax.random.randint(ks[9], (B, U, 1), 0, H, jnp.int32)
    unit_cols = jax.random.randint(ks[10], (B, U, 1), 0, W, jnp.int32)
    unit_indices = jnp.concatenate([unit_rows, unit_cols], axis=-1)          # (B,U,2)
    unit_energies = jax.random.uniform(ks[11], (B, U), jnp.float32)          # (B,U)

    # Layout/pad work done once, outside the per-call hot path.
    prep = prepare_params(params, D_MODEL)

    fwd = jax.jit(critic_head_forward)
    baseline_value, factorized_value = jax.block_until_ready(
        fwd(x, unit_indices, unit_energies, prep)
    )
    ref_base, ref_fact = jax.block_until_ready(
        reference_forward(x, unit_indices, unit_energies, params)
    )

    assert baseline_value.shape == (B,)
    assert factorized_value.shape == (B, U)
    # All-f32 kernel -> tight tolerance vs the f32 reference.
    np.testing.assert_allclose(np.asarray(baseline_value), np.asarray(ref_base),
                               rtol=1e-4, atol=1e-4)
    np.testing.assert_allclose(np.asarray(factorized_value), np.asarray(ref_fact),
                               rtol=1e-4, atol=1e-4)
    print("KERNEL_OK")
</pallas_src>

<mosaic_0001>
module attributes {stable_mosaic.version = 11 : i64} {
  func.func @critic_kernel(%arg0: i32, %arg1: i32, %arg2: memref<1x32x256xf32, #tpu.memory_space<vmem>>, %arg3: memref<32x32xf32, #tpu.memory_space<vmem>>, %arg4: memref<32x1xf32, #tpu.memory_space<vmem>>, %arg5: memref<32x1xf32, #tpu.memory_space<vmem>>, %arg6: memref<1x1xf32, #tpu.memory_space<smem>>, %arg7: memref<1x40x128xf32, #tpu.memory_space<vmem>>, %arg8: memref<32x40xf32, #tpu.memory_space<vmem>>, %arg9: memref<32x1xf32, #tpu.memory_space<vmem>>, %arg10: memref<32x1xf32, #tpu.memory_space<vmem>>, %arg11: memref<1x1xf32, #tpu.memory_space<smem>>, %arg12: memref<1x1x128xf32, #tpu.memory_space<vmem>>, %arg13: memref<1x1x128xf32, #tpu.memory_space<vmem>>, %arg14: memref<32x128xf32, #tpu.memory_space<vmem>>) attributes {dimension_semantics = [#tpu.dimension_semantics<parallel>, #tpu.dimension_semantics<arbitrary>], iteration_bounds = array<i64: 2, 1>, scalar_prefetch = 0 : i64, scratch_operands = 1 : i64, tpu.core_type = #tpu.core_type<tc>, window_params = [{transform_indices = @transform_0, window_bounds = array<i64: 1, 32, 256>}, {pipeline_mode = #tpu.pipeline_mode<synchronous>, transform_indices = @transform_1, window_bounds = array<i64: 32, 32>}, {pipeline_mode = #tpu.pipeline_mode<synchronous>, transform_indices = @transform_2, window_bounds = array<i64: 32, 1>}, {pipeline_mode = #tpu.pipeline_mode<synchronous>, transform_indices = @transform_3, window_bounds = array<i64: 32, 1>}, {transform_indices = @transform_4, window_bounds = array<i64: 1, 1>}, {transform_indices = @transform_5, window_bounds = array<i64: 1, 40, 128>}, {pipeline_mode = #tpu.pipeline_mode<synchronous>, transform_indices = @transform_6, window_bounds = array<i64: 32, 40>}, {pipeline_mode = #tpu.pipeline_mode<synchronous>, transform_indices = @transform_7, window_bounds = array<i64: 32, 1>}, {pipeline_mode = #tpu.pipeline_mode<synchronous>, transform_indices = @transform_8, window_bounds = array<i64: 32, 1>}, {transform_indices = @transform_9, window_bounds = array<i64: 1, 1>}, {transform_indices = @transform_10, window_bounds = array<i64: 1, 1, 128>}, {transform_indices = @transform_11, window_bounds = array<i64: 1, 1, 128>}]} {
    %c0_i32 = arith.constant 0 : i32
    %0 = arith.cmpi eq, %arg1, %c0_i32 : i32
    %1 = arith.extui %0 : i1 to i32
    %c0_i32_0 = arith.constant 0 : i32
    %2 = arith.cmpi ne, %1, %c0_i32_0 : i32
    scf.if %2 {
      %cst_18 = arith.constant 0.000000e+00 : f32
      %23 = vector.broadcast %cst_18 : f32 to vector<32x128xf32>
      %c0_19 = arith.constant 0 : index
      %c0_20 = arith.constant 0 : index
      %24 = vector.load %arg14[%c0_19, %c0_20] : memref<32x128xf32, #tpu.memory_space<vmem>>, vector<32x128xf32>
      tpu.vector_store %arg14[%c0_19, %c0_20], %23 {strides = array<i32>} : memref<32x128xf32, #tpu.memory_space<vmem>>, vector<32x128xf32>,
    } else {
    }
    %c0 = arith.constant 0 : index
    %c0_1 = arith.constant 0 : index
    %3 = vector.load %arg3[%c0, %c0_1] : memref<32x32xf32, #tpu.memory_space<vmem>>, vector<32x32xf32>
    %c0_2 = arith.constant 0 : index
    %c0_3 = arith.constant 0 : index
    %c0_4 = arith.constant 0 : index
    %4 = vector.load %arg2[%c0_2, %c0_3, %c0_4] : memref<1x32x256xf32, #tpu.memory_space<vmem>>, vector<1x32x256xf32>
    %5 = vector.shape_cast %4 : vector<1x32x256xf32> to vector<32x256xf32>
    %cst = arith.constant dense<0.000000e+00> : vector<32x256xf32>
    %6 = tpu.matmul %3, %5, %cst {dimension_numbers = #tpu.dot_dimension_numbers<[1], [0], [0], [1], [0, 0, 1, 1], [], []>} : vector<32x32xf32>, vector<32x256xf32>, vector<32x256xf32> -> vector<32x256xf32>
    %c0_5 = arith.constant 0 : index
    %c0_6 = arith.constant 0 : index
    %7 = vector.load %arg4[%c0_5, %c0_6] : memref<32x1xf32, #tpu.memory_space<vmem>>, vector<32x1xf32>
    %8 = vector.broadcast %7 : vector<32x1xf32> to vector<32x256xf32>
    %9 = arith.addf %6, %8 : vector<32x256xf32>
    %cst_7 = arith.constant 0.000000e+00 : f32
    %10 = vector.broadcast %cst_7 : f32 to vector<32x256xf32>
    %11 = arith.maximumf %9, %10 : vector<32x256xf32>
    %c0_8 = arith.constant 0 : index
    %c0_9 = arith.constant 0 : index
    %12 = vector.load %arg14[%c0_8, %c0_9] : memref<32x128xf32, #tpu.memory_space<vmem>>, vector<32x128xf32>
    %13 = vector.extract_strided_slice %11 {offsets = [0, 0], sizes = [32, 128], strides = [1, 1]} : vector<32x256xf32> to vector<32x128xf32>
    %14 = arith.addf %12, %13 : vector<32x128xf32>
    %c0_10 = arith.constant 0 : index
    %c0_11 = arith.constant 0 : index
    %15 = vector.load %arg14[%c0_10, %c0_11] : memref<32x128xf32, #tpu.memory_space<vmem>>, vector<32x128xf32>
    tpu.vector_store %arg14[%c0_10, %c0_11], %14 {strides = array<i32>} : memref<32x128xf32, #tpu.memory_space<vmem>>, vector<32x128xf32>,
    %c0_12 = arith.constant 0 : index
    %c0_13 = arith.constant 0 : index
    %16 = vector.load %arg14[%c0_12, %c0_13] : memref<32x128xf32, #tpu.memory_space<vmem>>, vector<32x128xf32>
    %17 = vector.extract_strided_slice %11 {offsets = [0, 128], sizes = [32, 128], strides = [1, 1]} : vector<32x256xf32> to vector<32x128xf32>
    %18 = arith.addf %16, %17 : vector<32x128xf32>
    %c0_14 = arith.constant 0 : index
    %c0_15 = arith.constant 0 : index
    %19 = vector.load %arg14[%c0_14, %c0_15] : memref<32x128xf32, #tpu.memory_space<vmem>>, vector<32x128xf32>
    tpu.vector_store %arg14[%c0_14, %c0_15], %18 {strides = array<i32>} : memref<32x128xf32, #tpu.memory_space<vmem>>, vector<32x128xf32>,
    %c0_i32_16 = arith.constant 0 : i32
    %20 = arith.cmpi eq, %arg1, %c0_i32_16 : i32
    %21 = arith.extui %20 : i1 to i32
    %c0_i32_17 = arith.constant 0 : i32
    %22 = arith.cmpi ne, %21, %c0_i32_17 : i32
    scf.if %22 {
      %c0_18 = arith.constant 0 : index
      %c0_19 = arith.constant 0 : index
      %23 = vector.load %arg14[%c0_18, %c0_19] : memref<32x128xf32, #tpu.memory_space<vmem>>, vector<32x128xf32>
      %cst_20 = arith.constant dense<0.000000e+00> : vector<32xf32>
      %24 = vector.multi_reduction <add>, %23, %cst_20 [1] : vector<32x128xf32> to vector<32xf32>
      %25 = vector.shape_cast %24 : vector<32xf32> to vector<32x1xf32>
      %cst_21 = arith.constant 3.906250e-03 : f32
      %26 = vector.broadcast %cst_21 : f32 to vector<32x1xf32>
      %27 = arith.mulf %25, %26 : vector<32x1xf32>
      %c0_22 = arith.constant 0 : index
      %c0_23 = arith.constant 0 : index
      %28 = vector.load %arg5[%c0_22, %c0_23] : memref<32x1xf32, #tpu.memory_space<vmem>>, vector<32x1xf32>
      %29 = arith.mulf %27, %28 : vector<32x1xf32>
      %cst_24 = arith.constant dense<0.000000e+00> : vector<1xf32>
      %30 = vector.multi_reduction <add>, %29, %cst_24 [0] : vector<32x1xf32> to vector<1xf32>
      %31 = vector.shape_cast %30 : vector<1xf32> to vector<1x1xf32>
      %c0_25 = arith.constant 0 : index
      %c0_26 = arith.constant 0 : index
      %32 = memref.load %arg6[%c0_25, %c0_26] : memref<1x1xf32, #tpu.memory_space<smem>>
      %33 = vector.broadcast %32 : f32 to vector<1x1xf32>
      %34 = arith.addf %31, %33 : vector<1x1xf32>
      %35 = vector.shape_cast %34 : vector<1x1xf32> to vector<1x1x1xf32>
      %36 = vector.shape_cast %35 : vector<1x1x1xf32> to vector<1x1x1xf32>
      %37 = vector.broadcast %36 : vector<1x1x1xf32> to vector<1x1x128xf32>
      %c0_27 = arith.constant 0 : index
      %c0_28 = arith.constant 0 : index
      %c0_29 = arith.constant 0 : index
      %38 = vector.load %arg12[%c0_27, %c0_28, %c0_29] : memref<1x1x128xf32, #tpu.memory_space<vmem>>, vector<1x1x128xf32>
      tpu.vector_store %arg12[%c0_27, %c0_28, %c0_29], %37 {strides = array<i32>} : memref<1x1x128xf32, #tpu.memory_space<vmem>>, vector<1x1x128xf32>,
      %c0_30 = arith.constant 0 : index
      %c0_31 = arith.constant 0 : index
      %39 = vector.load %arg8[%c0_30, %c0_31] : memref<32x40xf32, #tpu.memory_space<vmem>>, vector<32x40xf32>
      %c0_32 = arith.constant 0 : index
      %c0_33 = arith.constant 0 : index
      %c0_34 = arith.constant 0 : index
      %40 = vector.load %arg7[%c0_32, %c0_33, %c0_34] : memref<1x40x128xf32, #tpu.memory_space<vmem>>, vector<1x40x128xf32>
      %41 = vector.shape_cast %40 : vector<1x40x128xf32> to vector<40x128xf32>
      %cst_35 = arith.constant dense<0.000000e+00> : vector<32x128xf32>
      %42 = tpu.matmul %39, %41, %cst_35 {dimension_numbers = #tpu.dot_dimension_numbers<[1], [0], [0], [1], [0, 0, 1, 1], [], []>} : vector<32x40xf32>, vector<40x128xf32>, vector<32x128xf32> -> vector<32x128xf32>
      %c0_36 = arith.constant 0 : index
      %c0_37 = arith.constant 0 : index
      %43 = vector.load %arg9[%c0_36, %c0_37] : memref<32x1xf32, #tpu.memory_space<vmem>>, vector<32x1xf32>
      %44 = vector.broadcast %43 : vector<32x1xf32> to vector<32x128xf32>
      %45 = arith.addf %42, %44 : vector<32x128xf32>
      %cst_38 = arith.constant 0.000000e+00 : f32
      %46 = vector.broadcast %cst_38 : f32 to vector<32x128xf32>
      %47 = arith.maximumf %45, %46 : vector<32x128xf32>
      %c0_39 = arith.constant 0 : index
      %c0_40 = arith.constant 0 : index
      %48 = vector.load %arg10[%c0_39, %c0_40] : memref<32x1xf32, #tpu.memory_space<vmem>>, vector<32x1xf32>
      %49 = vector.broadcast %48 : vector<32x1xf32> to vector<32x128xf32>
      %50 = arith.mulf %47, %49 : vector<32x128xf32>
      %cst_41 = arith.constant dense<0.000000e+00> : vector<128xf32>
      %51 = vector.multi_reduction <add>, %50, %cst_41 [0] : vector<32x128xf32> to vector<128xf32>
      %52 = vector.shape_cast %51 : vector<128xf32> to vector<1x128xf32>
      %c0_42 = arith.constant 0 : index
      %c0_43 = arith.constant 0 : index
      %53 = memref.load %arg11[%c0_42, %c0_43] : memref<1x1xf32, #tpu.memory_space<smem>>
      %54 = vector.broadcast %53 : f32 to vector<1x128xf32>
      %55 = arith.addf %52, %54 : vector<1x128xf32>
      %56 = vector.shape_cast %55 : vector<1x128xf32> to vector<1x1x128xf32>
      %c0_44 = arith.constant 0 : index
      %c0_45 = arith.constant 0 : index
      %c0_46 = arith.constant 0 : index
      %57 = vector.load %arg13[%c0_44, %c0_45, %c0_46] : memref<1x1x128xf32, #tpu.memory_space<vmem>>, vector<1x1x128xf32>
      tpu.vector_store %arg13[%c0_44, %c0_45, %c0_46], %56 {strides = array<i32>} : memref<1x1x128xf32, #tpu.memory_space<vmem>>, vector<1x1x128xf32>,
    } else {
    }
    return
  }
  func.func @transform_0(%arg0: i32, %arg1: i32) -> (i32, i32, i32) {
    %c0_i32 = arith.constant 0 : i32
    %c0_i32_0 = arith.constant 0 : i32
    return %arg0, %c0_i32, %arg1 : i32, i32, i32
  }
  func.func @transform_1(%arg0: i32, %arg1: i32) -> (i32, i32) {
    %c0_i32 = arith.constant 0 : i32
    %c0_i32_0 = arith.constant 0 : i32
    %c0_i32_1 = arith.constant 0 : i32
    return %c0_i32, %c0_i32_0 : i32, i32
  }
  func.func @transform_2(%arg0: i32, %arg1: i32) -> (i32, i32) {
    %c0_i32 = arith.constant 0 : i32
    %c0_i32_0 = arith.constant 0 : i32
    %c0_i32_1 = arith.constant 0 : i32
    return %c0_i32, %c0_i32_0 : i32, i32
  }
  func.func @transform_3(%arg0: i32, %arg1: i32) -> (i32, i32) {
    %c0_i32 = arith.constant 0 : i32
    %c0_i32_0 = arith.constant 0 : i32
    %c0_i32_1 = arith.constant 0 : i32
    return %c0_i32, %c0_i32_0 : i32, i32
  }
  func.func @transform_4(%arg0: i32, %arg1: i32) -> (i32, i32) {
    %c0_i32 = arith.constant 0 : i32
    %c0_i32_0 = arith.constant 0 : i32
    %c0_i32_1 = arith.constant 0 : i32
    return %c0_i32, %c0_i32_0 : i32, i32
  }
  func.func @transform_5(%arg0: i32, %arg1: i32) -> (i32, i32, i32) {
    %c0_i32 = arith.constant 0 : i32
    %c0_i32_0 = arith.constant 0 : i32
    %c0_i32_1 = arith.constant 0 : i32
    return %arg0, %c0_i32, %c0_i32_0 : i32, i32, i32
  }
  func.func @transform_6(%arg0: i32, %arg1: i32) -> (i32, i32) {
    %c0_i32 = arith.constant 0 : i32
    %c0_i32_0 = arith.constant 0 : i32
    %c0_i32_1 = arith.constant 0 : i32
    return %c0_i32, %c0_i32_0 : i32, i32
  }
  func.func @transform_7(%arg0: i32, %arg1: i32) -> (i32, i32) {
    %c0_i32 = arith.constant 0 : i32
    %c0_i32_0 = arith.constant 0 : i32
    %c0_i32_1 = arith.constant 0 : i32
    return %c0_i32, %c0_i32_0 : i32, i32
  }
  func.func @transform_8(%arg0: i32, %arg1: i32) -> (i32, i32) {
    %c0_i32 = arith.constant 0 : i32
    %c0_i32_0 = arith.constant 0 : i32
    %c0_i32_1 = arith.constant 0 : i32
    return %c0_i32, %c0_i32_0 : i32, i32
  }
  func.func @transform_9(%arg0: i32, %arg1: i32) -> (i32, i32) {
    %c0_i32 = arith.constant 0 : i32
    %c0_i32_0 = arith.constant 0 : i32
    %c0_i32_1 = arith.constant 0 : i32
    return %c0_i32, %c0_i32_0 : i32, i32
  }
  func.func @transform_10(%arg0: i32, %arg1: i32) -> (i32, i32, i32) {
    %c0_i32 = arith.constant 0 : i32
    %c0_i32_0 = arith.constant 0 : i32
    %c0_i32_1 = arith.constant 0 : i32
    return %arg0, %c0_i32, %c0_i32_0 : i32, i32, i32
  }
  func.func @transform_11(%arg0: i32, %arg1: i32) -> (i32, i32, i32) {
    %c0_i32 = arith.constant 0 : i32
    %c0_i32_0 = arith.constant 0 : i32
    %c0_i32_1 = arith.constant 0 : i32
    return %arg0, %c0_i32, %c0_i32_0 : i32, i32, i32
  }
}

</mosaic_0001>

<llo_original>
// kernel: critic_head_forward.1
$region0: #{critic_head_forward.1}
  #allocation0 [shape = 'u32[]', space=smem, size = 0x4, offset = 0x4, fixed_abs, tag = 'smem constant byte address 0x4 - core index']
  #allocation1 [shape = 'u32[72,128]{1,0:T(1,128)}', space=vmem, size = 0x9000, scoped, tag = 'internal scratch']
  #allocation2 [shape = 'f32[32,128]{1,0:T(8,128)}', space=vmem, size = 0x4000, scoped, tag = 'scratch operand']
  #allocation3 [shape = 'f32[1,1]{1,0:T(1,128)S(6)}', space=smem, size = 0x200, scoped, tag = 'scoped memory for critic_head_forward.1']
  #allocation4 [shape = 'f32[1,1]{1,0:T(1,128)S(6)}', space=smem, size = 0x200, scoped, tag = 'scoped memory for critic_head_forward.1']
  %s0 = inlined_call_operand.vmem [shape: f32[2,32,256], index: 0, kind: input, shape index: {}]
  %s1 = inlined_call_operand.vmem [shape: f32[32,32], index: 1, kind: input, shape index: {}]
  %s2 = inlined_call_operand.vmem [shape: f32[32,1], index: 2, kind: input, shape index: {}]
  %s3 = inlined_call_operand.vmem [shape: f32[32,1], index: 3, kind: input, shape index: {}]
  %s4 = inlined_call_operand.<no memory space> [shape: f32[1,1], index: 4, kind: input, shape index: {}]
  %s5 = inlined_call_operand.vmem [shape: f32[2,40,128], index: 5, kind: input, shape index: {}]
  %s6 = inlined_call_operand.vmem [shape: f32[32,40], index: 6, kind: input, shape index: {}]
  %s7 = inlined_call_operand.vmem [shape: f32[32,1], index: 7, kind: input, shape index: {}]
  %s8 = inlined_call_operand.vmem [shape: f32[32,1], index: 8, kind: input, shape index: {}]
  %s9 = inlined_call_operand.<no memory space> [shape: f32[1,1], index: 9, kind: input, shape index: {}]
  %s10 = inlined_call_operand.vmem [shape: f32[2,1,128], index: 10, kind: output, shape index: {0}]
  %s11 = inlined_call_operand.hbm [shape: f32[2,1,128], index: 11, kind: output, shape index: {1}]
  %12 = xla_tuple %s10, %s11
  %s13 = sld [smem:[#allocation0]]
  $region89: #{critic_head_forward.1} parent=0
    _
  %s15 = ssub.s32 1, %s13
  %s16 = scalar_select 0, %s15, %s13
  %17 = sst [smem:[#allocation3]] %s4
  %18 = sst [smem:[#allocation4]] %s9
  $region1: #{critic_head_forward.1} parent=0
    #allocation5 [shape = 'u8[1024]{0}', space=vmem, size = 0x400, scoped, tag = 'output window, operand 1']
    #allocation6 [shape = 's32[2]{0}', space=sflag, size = 0x8, scoped, tag = 'scoped memory for critic_head_forward.1']
    %19 = vsyncpa [#allocation6], 0
    %s20 = scalar_lea.sflag [#allocation6], 1
    %21 = vsyncpa %s20, 0
    loop: start=0, step=1, limit=4
    $region2: #{critic_head_forward.1} parent=1 // loop_pre_header
      _
    $region3: #{critic_head_forward.1} parent=1 // loop_header
      %s23 = sphi 0, %s27
      %p24 = scmp.ge.s32.totalorder %s23, 4
      %s30 = sphi 0, %s42
      %s31 = sphi 0, %s38
      %s32 = sphi 0, %s30
      %s33 = sphi 0, %s31
      %s34 = sphi 0, %s32
      %s35 = sphi 0, %s33
      %s47 = sphi 0, %s49
      %s50 = sphi 0, %s47
      %s51 = sphi 0, %s50
      %s67 = sphi 0, %s51
      %s71 = sphi 0, %s71
      %s73 = sphi 0, %s71
      %s74 = sphi 0, %s73
      %s88 = sphi 0, %s74
      %s92 = sphi 0, %s92
      %s94 = sphi 0, %s92
      %s95 = sphi 0, %s94
      %s109 = sphi 0, %s95
      %s113 = sphi 0, %s113
      %s115 = sphi 0, %s113
      %s116 = sphi 0, %s115
      %s130 = sphi 0, %s116
      %s134 = sphi 0, %s134
      %s136 = sphi 0, %s134
      %s137 = sphi 0, %s136
      %s151 = sphi 0, %s137
      %s157 = sphi 0, %s159
      %s160 = sphi 0, %s157
      %s161 = sphi 0, %s160
      %s177 = sphi 0, %s161
      %s181 = sphi 0, %s181
      %s183 = sphi 0, %s181
      %s184 = sphi 0, %s183
      %s198 = sphi 0, %s184
      %s202 = sphi 0, %s202
      %s204 = sphi 0, %s202
      %s205 = sphi 0, %s204
      %s219 = sphi 0, %s205
      %s223 = sphi 0, %s223
      %s225 = sphi 0, %s223
      %s226 = sphi 0, %s225
      %s240 = sphi 0, %s226
      %s244 = sphi 0, %s244
      %s246 = sphi 0, %s244
      %s247 = sphi 0, %s246
      %s261 = sphi 0, %s247
      %s267 = sphi 0, %s269
      %s270 = sphi 0, %s267
      %s271 = sphi 0, %s270
      %s287 = sphi 0, %s271
      %s293 = sphi 0, %s295
      %s296 = sphi 0, %s293
      %s297 = sphi 0, %s296
      %s313 = sphi 0, %s297
    $region4: #{critic_head_forward.1} parent=1 // loop_header_branch
      %26 = sbr.rel (%p24) target = $region8
    $region5: #{critic_head_forward.1} parent=1 // loop_body
      %s28 = ssub.s32 %s23, 1
      %s29 = ssub.s32 %s23, 2
      %s36 = sadd.s32 1, %s31
      %p37 = scmp.ge.s32.totalorder %s36, 1
      %s38 = scalar_select %p37, 0, %s36
      %s39 = sadd.s32 1, %s30
      %s40 = scalar_select %p37, %s39, %s30
      %p41 = scmp.ge.s32.totalorder %s40, 2
      %s42 = scalar_select %p41, 0, %s40
      %s43 = ssub.s32 %s30, %s42
      %s44 = ssub.s32 %s31, %s38
      %s45 = sor.u32 %s43, %s44
      %p46 = scmp.eq.s32.totalorder %s45, 0
      %s48 = sadd.s32 %s47, 1
      %s49 = scalar_select %p46, %s47, %s48
      %p52 = pneg %p46
      %p53 = scmp.eq.s32.totalorder %s23, 1
      %p54 = por %p52, %p53
      %p55 = scmp.ne.s32.totalorder %s47, %s50
      %p56 = scmp.eq.s32.totalorder %s23, 0
      %p57 = por %p55, %p56
      %p58 = scmp.ne.s32.totalorder %s47, %s50
      %p59 = scmp.eq.s32.totalorder %s28, 1
      %p60 = por %p58, %p59
      %p61 = scmp.ne.s32.totalorder %s50, %s51
      %p62 = scmp.eq.s32.totalorder %s28, 0
      %p63 = por %p61, %p62
      %p64 = scmp.ne.s32.totalorder %s50, %s51
      %p65 = scmp.eq.s32.totalorder %s29, 1
      %p66 = por %p64, %p65
      %p68 = scmp.ne.s32.totalorder %s51, %s67
      %p69 = scmp.eq.s32.totalorder %s29, 0
      %p70 = por %p68, %p69
      %s72 = sadd.s32 %s71, 1
      %p75 = scmp.eq.s32.totalorder %s23, 1
      %p76 = scmp.ne.s32.totalorder %s71, %s73
      %p77 = scmp.eq.s32.totalorder %s23, 0
      %p78 = por %p76, %p77
      %p79 = scmp.ne.s32.totalorder %s71, %s73
      %p80 = scmp.eq.s32.totalorder %s28, 1
      %p81 = por %p79, %p80
      %p82 = scmp.ne.s32.totalorder %s73, %s74
      %p83 = scmp.eq.s32.totalorder %s28, 0
      %p84 = por %p82, %p83
      %p85 = scmp.ne.s32.totalorder %s73, %s74
      %p86 = scmp.eq.s32.totalorder %s29, 1
      %p87 = por %p85, %p86
      %p89 = scmp.ne.s32.totalorder %s74, %s88
      %p90 = scmp.eq.s32.totalorder %s29, 0
      %p91 = por %p89, %p90
      %s93 = sadd.s32 %s92, 1
      %p96 = scmp.eq.s32.totalorder %s23, 1
      %p97 = scmp.ne.s32.totalorder %s92, %s94
      %p98 = scmp.eq.s32.totalorder %s23, 0
      %p99 = por %p97, %p98
      %p100 = scmp.ne.s32.totalorder %s92, %s94
      %p101 = scmp.eq.s32.totalorder %s28, 1
      %p102 = por %p100, %p101
      %p103 = scmp.ne.s32.totalorder %s94, %s95
      %p104 = scmp.eq.s32.totalorder %s28, 0
      %p105 = por %p103, %p104
      %p106 = scmp.ne.s32.totalorder %s94, %s95
      %p107 = scmp.eq.s32.totalorder %s29, 1
      %p108 = por %p106, %p107
      %p110 = scmp.ne.s32.totalorder %s95, %s109
      %p111 = scmp.eq.s32.totalorder %s29, 0
      %p112 = por %p110, %p111
      %s114 = sadd.s32 %s113, 1
      %p117 = scmp.eq.s32.totalorder %s23, 1
      %p118 = scmp.ne.s32.totalorder %s113, %s115
      %p119 = scmp.eq.s32.totalorder %s23, 0
      %p120 = por %p118, %p119
      %p121 = scmp.ne.s32.totalorder %s113, %s115
      %p122 = scmp.eq.s32.totalorder %s28, 1
      %p123 = por %p121, %p122
      %p124 = scmp.ne.s32.totalorder %s115, %s116
      %p125 = scmp.eq.s32.totalorder %s28, 0
      %p126 = por %p124, %p125
      %p127 = scmp.ne.s32.totalorder %s115, %s116
      %p128 = scmp.eq.s32.totalorder %s29, 1
      %p129 = por %p127, %p128
      %p131 = scmp.ne.s32.totalorder %s116, %s130
      %p132 = scmp.eq.s32.totalorder %s29, 0
      %p133 = por %p131, %p132
      %s135 = sadd.s32 %s134, 1
      %p138 = scmp.eq.s32.totalorder %s23, 1
      %p139 = scmp.ne.s32.totalorder %s134, %s136
      %p140 = scmp.eq.s32.totalorder %s23, 0
      %p141 = por %p139, %p140
      %p142 = scmp.ne.s32.totalorder %s134, %s136
      %p143 = scmp.eq.s32.totalorder %s28, 1
      %p144 = por %p142, %p143
      %p145 = scmp.ne.s32.totalorder %s136, %s137
      %p146 = scmp.eq.s32.totalorder %s28, 0
      %p147 = por %p145, %p146
      %p148 = scmp.ne.s32.totalorder %s136, %s137
      %p149 = scmp.eq.s32.totalorder %s29, 1
      %p150 = por %p148, %p149
      %p152 = scmp.ne.s32.totalorder %s137, %s151
      %p153 = scmp.eq.s32.totalorder %s29, 0
      %p154 = por %p152, %p153
      %s155 = ssub.s32 %s30, %s42
      %p156 = scmp.eq.s32.totalorder %s155, 0
      %s158 = sadd.s32 %s157, 1
      %s159 = scalar_select %p156, %s157, %s158
      %p162 = pneg %p156
      %p163 = scmp.eq.s32.totalorder %s23, 1
      %p164 = por %p162, %p163
      %p165 = scmp.ne.s32.totalorder %s157, %s160
      %p166 = scmp.eq.s32.totalorder %s23, 0
      %p167 = por %p165, %p166
      %p168 = scmp.ne.s32.totalorder %s157, %s160
      %p169 = scmp.eq.s32.totalorder %s28, 1
      %p170 = por %p168, %p169
      %p171 = scmp.ne.s32.totalorder %s160, %s161
      %p172 = scmp.eq.s32.totalorder %s28, 0
      %p173 = por %p171, %p172
      %p174 = scmp.ne.s32.totalorder %s160, %s161
      %p175 = scmp.eq.s32.totalorder %s29, 1
      %p176 = por %p174, %p175
      %p178 = scmp.ne.s32.totalorder %s161, %s177
      %p179 = scmp.eq.s32.totalorder %s29, 0
      %p180 = por %p178, %p179
      %s182 = sadd.s32 %s181, 1
      %p185 = scmp.eq.s32.totalorder %s23, 1
      %p186 = scmp.ne.s32.totalorder %s181, %s183
      %p187 = scmp.eq.s32.totalorder %s23, 0
      %p188 = por %p186, %p187
      %p189 = scmp.ne.s32.totalorder %s181, %s183
      %p190 = scmp.eq.s32.totalorder %s28, 1
      %p191 = por %p189, %p190
      %p192 = scmp.ne.s32.totalorder %s183, %s184
      %p193 = scmp.eq.s32.totalorder %s28, 0
      %p194 = por %p192, %p193
      %p195 = scmp.ne.s32.totalorder %s183, %s184
      %p196 = scmp.eq.s32.totalorder %s29, 1
      %p197 = por %p195, %p196
      %p199 = scmp.ne.s32.totalorder %s184, %s198
      %p200 = scmp.eq.s32.totalorder %s29, 0
      %p201 = por %p199, %p200
      %s203 = sadd.s32 %s202, 1
      %p206 = scmp.eq.s32.totalorder %s23, 1
      %p207 = scmp.ne.s32.totalorder %s202, %s204
      %p208 = scmp.eq.s32.totalorder %s23, 0
      %p209 = por %p207, %p208
      %p210 = scmp.ne.s32.totalorder %s202, %s204
      %p211 = scmp.eq.s32.totalorder %s28, 1
      %p212 = por %p210, %p211
      %p213 = scmp.ne.s32.totalorder %s204, %s205
      %p214 = scmp.eq.s32.totalorder %s28, 0
      %p215 = por %p213, %p214
      %p216 = scmp.ne.s32.totalorder %s204, %s205
      %p217 = scmp.eq.s32.totalorder %s29, 1
      %p218 = por %p216, %p217
      %p220 = scmp.ne.s32.totalorder %s205, %s219
      %p221 = scmp.eq.s32.totalorder %s29, 0
      %p222 = por %p220, %p221
      %s224 = sadd.s32 %s223, 1
      %p227 = scmp.eq.s32.totalorder %s23, 1
      %p228 = scmp.ne.s32.totalorder %s223, %s225
      %p229 = scmp.eq.s32.totalorder %s23, 0
      %p230 = por %p228, %p229
      %p231 = scmp.ne.s32.totalorder %s223, %s225
      %p232 = scmp.eq.s32.totalorder %s28, 1
      %p233 = por %p231, %p232
      %p234 = scmp.ne.s32.totalorder %s225, %s226
      %p235 = scmp.eq.s32.totalorder %s28, 0
      %p236 = por %p234, %p235
      %p237 = scmp.ne.s32.totalorder %s225, %s226
      %p238 = scmp.eq.s32.totalorder %s29, 1
      %p239 = por %p237, %p238
      %p241 = scmp.ne.s32.totalorder %s226, %s240
      %p242 = scmp.eq.s32.totalorder %s29, 0
      %p243 = por %p241, %p242
      %s245 = sadd.s32 %s244, 1
      %p248 = scmp.eq.s32.totalorder %s23, 1
      %p249 = scmp.ne.s32.totalorder %s244, %s246
      %p250 = scmp.eq.s32.totalorder %s23, 0
      %p251 = por %p249, %p250
      %p252 = scmp.ne.s32.totalorder %s244, %s246
      %p253 = scmp.eq.s32.totalorder %s28, 1
      %p254 = por %p252, %p253
      %p255 = scmp.ne.s32.totalorder %s246, %s247
      %p256 = scmp.eq.s32.totalorder %s28, 0
      %p257 = por %p255, %p256
      %p258 = scmp.ne.s32.totalorder %s246, %s247
      %p259 = scmp.eq.s32.totalorder %s29, 1
      %p260 = por %p258, %p259
      %p262 = scmp.ne.s32.totalorder %s247, %s261
      %p263 = scmp.eq.s32.totalorder %s29, 0
      %p264 = por %p262, %p263
      %s265 = ssub.s32 %s30, %s42
      %p266 = scmp.eq.s32.totalorder %s265, 0
      %s268 = sadd.s32 %s267, 1
      %s269 = scalar_select %p266, %s267, %s268
      %p272 = pneg %p266
      %p273 = scmp.eq.s32.totalorder %s23, 1
      %p274 = por %p272, %p273
      %p275 = scmp.ne.s32.totalorder %s267, %s270
      %p276 = scmp.eq.s32.totalorder %s23, 0
      %p277 = por %p275, %p276
      %p278 = scmp.ne.s32.totalorder %s267, %s270
      %p279 = scmp.eq.s32.totalorder %s28, 1
      %p280 = por %p278, %p279
      %p281 = scmp.ne.s32.totalorder %s270, %s271
      %p282 = scmp.eq.s32.totalorder %s28, 0
      %p283 = por %p281, %p282
      %p284 = scmp.ne.s32.totalorder %s270, %s271
      %p285 = scmp.eq.s32.totalorder %s29, 1
      %p286 = por %p284, %p285
      %p288 = scmp.ne.s32.totalorder %s271, %s287
      %p289 = scmp.eq.s32.totalorder %s29, 0
      %p290 = por %p288, %p289
      %s291 = ssub.s32 %s30, %s42
      %p292 = scmp.eq.s32.totalorder %s291, 0
      %s294 = sadd.s32 %s293, 1
      %s295 = scalar_select %p292, %s293, %s294
      %p298 = pneg %p292
      %p299 = scmp.eq.s32.totalorder %s23, 1
      %p300 = por %p298, %p299
      %p301 = scmp.ne.s32.totalorder %s293, %s296
      %p302 = scmp.eq.s32.totalorder %s23, 0
      %p303 = por %p301, %p302
      %p304 = scmp.ne.s32.totalorder %s293, %s296
      %p305 = scmp.eq.s32.totalorder %s28, 1
      %p306 = por %p304, %p305
      %p307 = scmp.ne.s32.totalorder %s296, %s297
      %p308 = scmp.eq.s32.totalorder %s28, 0
      %p309 = por %p307, %p308
      %p310 = scmp.ne.s32.totalorder %s296, %s297
      %p311 = scmp.eq.s32.totalorder %s29, 1
      %p312 = por %p310, %p311
      %p314 = scmp.ne.s32.totalorder %s297, %s313
      %p315 = scmp.eq.s32.totalorder %s29, 0
      %p316 = por %p314, %p315
      %p317 = scmp.le.s32.totalorder 1, %s23
      %p318 = scmp.lt.s32.totalorder %s23, 3
      %p319 = pnand %p317, %p318
      %p320 = pneg %p319
      // Predicated region
      $region9: #{critic_head_forward.1} parent=5 // pred_check
        _
      $region10: #{critic_head_forward.1} parent=5 // pred_check_branch
        %322 = sbr.rel (%p319) target = $region12
      $region11: #{critic_head_forward.1} parent=5 // pred_region
        %s323 = ssub.s32 %s23, 1
        // Predicated region
        $region13: #{critic_head_forward.1} parent=11 // pred_check
          %p324 = pneg %p84
        $region14: #{critic_head_forward.1} parent=11 // pred_check_branch
          %326 = sbr.rel (%p324) target = $region16
        $region15: #{critic_head_forward.1} parent=11 // pred_region
          _
        $region16: #{critic_head_forward.1} parent=11 // pred_fallthru
          _
        // Predicated region
        $region17: #{critic_head_forward.1} parent=11 // pred_check
          %p327 = pneg %p105
        $region18: #{critic_head_forward.1} parent=11 // pred_check_branch
          %329 = sbr.rel (%p327) target = $region20
        $region19: #{critic_head_forward.1} parent=11 // pred_region
          _
        $region20: #{critic_head_forward.1} parent=11 // pred_fallthru
          _
        // Predicated region
        $region21: #{critic_head_forward.1} parent=11 // pred_check
          %p330 = pneg %p126
        $region22: #{critic_head_forward.1} parent=11 // pred_check_branch
          %332 = sbr.rel (%p330) target = $region24
        $region23: #{critic_head_forward.1} parent=11 // pred_region
          _
        $region24: #{critic_head_forward.1} parent=11 // pred_fallthru
          _
        // Predicated region
        $region25: #{critic_head_forward.1} parent=11 // pred_check
          %p333 = pneg %p147
        $region26: #{critic_head_forward.1} parent=11 // pred_check_branch
          %335 = sbr.rel (%p333) target = $region28
        $region27: #{critic_head_forward.1} parent=11 // pred_region
          _
        $region28: #{critic_head_forward.1} parent=11 // pred_fallthru
          _
        // Predicated region
        $region29: #{critic_head_forward.1} parent=11 // pred_check
          %p336 = pneg %p194
        $region30: #{critic_head_forward.1} parent=11 // pred_check_branch
          %338 = sbr.rel (%p336) target = $region32
        $region31: #{critic_head_forward.1} parent=11 // pred_region
          _
        $region32: #{critic_head_forward.1} parent=11 // pred_fallthru
          _
        // Predicated region
        $region33: #{critic_head_forward.1} parent=11 // pred_check
          %p339 = pneg %p215
        $region34: #{critic_head_forward.1} parent=11 // pred_check_branch
          %341 = sbr.rel (%p339) target = $region36
        $region35: #{critic_head_forward.1} parent=11 // pred_region
          _
        $region36: #{critic_head_forward.1} parent=11 // pred_fallthru
          _
        // Predicated region
        $region37: #{critic_head_forward.1} parent=11 // pred_check
          %p342 = pneg %p236
        $region38: #{critic_head_forward.1} parent=11 // pred_check_branch
          %344 = sbr.rel (%p342) target = $region40
        $region39: #{critic_head_forward.1} parent=11 // pred_region
          _
        $region40: #{critic_head_forward.1} parent=11 // pred_fallthru
          _
        // Predicated region
        $region41: #{critic_head_forward.1} parent=11 // pred_check
          %p345 = pneg %p257
        $region42: #{critic_head_forward.1} parent=11 // pred_check_branch
          %347 = sbr.rel (%p345) target = $region44
        $region43: #{critic_head_forward.1} parent=11 // pred_region
          _
        $region44: #{critic_head_forward.1} parent=11 // pred_fallthru
          _
      $region12: #{critic_head_forward.1} parent=5 // pred_fallthru
        _
      %p348 = scmp.lt.s32.totalorder %s23, 2
      // Predicated region
      $region45: #{critic_head_forward.1} parent=5 // pred_check
        %p349 = pneg %p348
      $region46: #{critic_head_forward.1} parent=5 // pred_check_branch
        %351 = sbr.rel (%p349) target = $region48
      $region47: #{critic_head_forward.1} parent=5 // pred_region
        // Predicated region
        $region49: #{critic_head_forward.1} parent=47 // pred_check
          %p352 = pneg %p57
        $region50: #{critic_head_forward.1} parent=47 // pred_check_branch
          %354 = sbr.rel (%p352) target = $region52
        $region51: #{critic_head_forward.1} parent=47 // pred_region
          %s355 = smul.u32 2, %s31
          %p356 = scmp.lt.s32.totalorder %s30, 1
          %s357 = scalar_select %p356, %s30, 1
          %p358 = scmp.lt.s32.totalorder %s355, 1
          %s359 = scalar_select %p358, %s355, 1
          %s360 = smul.addr %s357, 8
          %s361 = sadd.s32 %s359, %s360
          %s362 = smul.addr %s361, 8
          %s363 = scalar_lea.vmem %s0, %s362
          %s364 = smul.u32 2, %s31
        $region52: #{critic_head_forward.1} parent=47 // pred_fallthru
          _
        // Predicated region
        $region53: #{critic_head_forward.1} parent=47 // pred_check
          %p365 = pneg %p167
        $region54: #{critic_head_forward.1} parent=47 // pred_check_branch
          %367 = sbr.rel (%p365) target = $region56
        $region55: #{critic_head_forward.1} parent=47 // pred_region
          %p368 = scmp.lt.s32.totalorder %s30, 1
          %s369 = scalar_select %p368, %s30, 1
          %s370 = smul.addr %s369, 5
          %s371 = smul.addr %s370, 8
          %s372 = scalar_lea.vmem %s5, %s371
        $region56: #{critic_head_forward.1} parent=47 // pred_fallthru
          _
      $region48: #{critic_head_forward.1} parent=5 // pred_fallthru
        _
      %p373 = scmp.le.s32.totalorder 1, %s23
      %p374 = scmp.lt.s32.totalorder %s23, 3
      %p375 = pnand %p373, %p374
      %p376 = pneg %p375
      // Predicated region
      $region57: #{critic_head_forward.1} parent=5 // pred_check
        _
      $region58: #{critic_head_forward.1} parent=5 // pred_check_branch
        %378 = sbr.rel (%p375) target = $region60
      $region59: #{critic_head_forward.1} parent=5 // pred_region
        %s379 = ssub.s32 %s23, 1
        %s380 = smul.u32 2, %s33
        %p381 = scmp.lt.s32.totalorder %s32, 1
        %s382 = scalar_select %p381, %s32, 1
        %p383 = scmp.lt.s32.totalorder %s380, 1
        %s384 = scalar_select %p383, %s380, 1
        %s385 = smul.addr %s382, 8
        %s386 = sadd.s32 %s384, %s385
        %s387 = smul.addr %s386, 8
        %s388 = scalar_lea.vmem %s0, %s387
        %p389 = pneg %p63
        %p390 = pneg %p60
        %p391 = pneg %p84
        %p392 = pneg %p81
        %p393 = pneg %p105
        %p394 = pneg %p102
        %p395 = pneg %p126
        %p396 = pneg %p123
        %p397 = pneg %p147
        %p398 = pneg %p144
        %p399 = scmp.lt.s32.totalorder %s32, 1
        %s400 = scalar_select %p399, %s32, 1
        %s401 = smul.addr %s400, 5
        %s402 = smul.addr %s401, 8
        %s403 = scalar_lea.vmem %s5, %s402
        %p404 = pneg %p173
        %p405 = pneg %p170
        %p406 = pneg %p194
        %p407 = pneg %p191
        %p408 = pneg %p215
        %p409 = pneg %p212
        %p410 = pneg %p236
        %p411 = pneg %p233
        %p412 = pneg %p257
        %p413 = pneg %p254
        %p414 = pneg %p283
        %p415 = pneg %p280
        %p416 = scmp.lt.s32.totalorder %s32, 1
        %s417 = scalar_select %p416, %s32, 1
        %s418 = scalar_lea.vmem %s10, %s417
        %p419 = pneg %p309
        %p420 = pneg %p306
        %s421 = sand.u32 %s296, 1
        %s422 = scalar_lea.sflag [#allocation6], %s421
        %s423 = sand.u32 %s296, 1
        %s424 = scalar_lea.vmem [#allocation5], %s423
        %s425 = smul.u32 2, %s33
        %p426 = scmp.lt.s32.totalorder %s32, 1
        %s427 = scalar_select %p426, %s32, 1
        %p428 = scmp.lt.s32.totalorder %s425, 1
        %s429 = scalar_select %p428, %s425, 1
        %s430 = smul.addr %s427, 8
        %s431 = sadd.s32 %s429, %s430
        %s432 = smul.addr %s431, 8
        %s433 = scalar_lea.vmem %s0, %s432
        %s434 = smul.u32 2, %s33
        %p435 = scmp.lt.s32.totalorder %s32, 1
        %s436 = scalar_select %p435, %s32, 1
        %s437 = smul.addr %s436, 5
        %s438 = smul.addr %s437, 8
        %s439 = scalar_lea.vmem %s5, %s438
        %p440 = scmp.lt.s32.totalorder %s32, 1
        %s441 = scalar_select %p440, %s32, 1
        %s442 = scalar_lea.vmem %s10, %s441
        %p443 = scmp.eq.s32.totalorder %s33, 0
        // Predicated region
        $region61: #{critic_head_forward.1} parent=59 // pred_check
          %p444 = pneg %p443
        $region62: #{critic_head_forward.1} parent=59 // pred_check_branch
          %446 = sbr.rel (%p444) target = $region64
        $region63: #{critic_head_forward.1} parent=59 // pred_region
          %447 = vst [vmem:[#allocation2] sm:$0xff] 0.0
          %448 = vst [vmem:[#allocation2 + $0x8] sm:$0xff] 0.0
          %449 = vst [vmem:[#allocation2 + $0x10] sm:$0xff] 0.0
          %450 = vst [vmem:[#allocation2 + $0x18] sm:$0xff] 0.0
        $region64: #{critic_head_forward.1} parent=59 // pred_fallthru
          _
        %v451 = vld [vmem:[%s1] sm:$0xff]
        %v452 = vld [vmem:[%s1 + $0x8] sm:$0xff]
        %v453 = vld [vmem:[%s1 + $0x10] sm:$0xff]
        %v454 = vld [vmem:[%s1 + $0x18] sm:$0xff]
        %v455 = vld [vmem:[%s433] sm:$0xff]
        %v456 = vld [vmem:[%s433 + $0x8] sm:$0xff]
        %v457 = vld [vmem:[%s433 + $0x10] sm:$0xff]
        %v458 = vld [vmem:[%s433 + $0x18] sm:$0xff]
        %v459 = vld [vmem:[%s433 + $0x20] sm:$0xff]
        %v460 = vld [vmem:[%s433 + $0x28] sm:$0xff]
        %v461 = vld [vmem:[%s433 + $0x30] sm:$0xff]
        %v462 = vld [vmem:[%s433 + $0x38] sm:$0xff]
        %v463 = vld [vmem:[%s2] sm:$0xff]
        %v464 = vld [vmem:[%s2 + $0x8] sm:$0xff]
        %v465 = vld [vmem:[%s2 + $0x10] sm:$0xff]
        %v466 = vld [vmem:[%s2 + $0x18] sm:$0xff]
        %468 = vset.pattern.permute.xlu0 0
        %469 = vperm.xlu0 %468, %v463
        %v470 = vpop.permute.xlu0 %469
        %473 = vset.pattern.permute.xlu0 0
        %474 = vperm.xlu0 %473, %v464
        %v475 = vpop.permute.xlu0 %474
        %478 = vset.pattern.permute.xlu0 0
        %479 = vperm.xlu0 %478, %v465
        %v480 = vpop.permute.xlu0 %479
        %483 = vset.pattern.permute.xlu0 0
        %484 = vperm.xlu0 %483, %v466
        %v485 = vpop.permute.xlu0 %484
        %vm487 = vcmask 261120
        %v489 = vsel %vm487, %v451, 0
        %v492 = vsel %vm487, %v452, 0
        %v495 = vsel %vm487, %v453, 0
        %v498 = vsel %vm487, %v454, 0
        %500 = vmatpush.msra.mxu0 0.0
        %501 = vmatpush.msra.mxu0 0.0
        %502 = vmatpush.msra.mxu0 0.0
        %503 = vmatpush.msra.mxu0 0.0
        %504 = vmatpush.msra.mxu0 0.0
        %505 = vmatpush.msra.mxu0 0.0
        %506 = vmatpush.msra.mxu0 0.0
        %507 = vmatpush.msra.mxu0 0.0
        %508 = vmatpush.msra.mxu0 0.0
        %509 = vmatpush.msra.mxu0 0.0
        %510 = vmatpush.msra.mxu0 0.0
        %511 = vmatpush.msra.mxu0 0.0
        %512 = vmatpush.msra.mxu0 %v461
        %513 = vmatpush.msra.mxu0 %v459
        %514 = vmatpush.msra.mxu0 %v457
        %515 = vmatpush.msra.mxu0 %v455
        %516 = vmatmul.f32.gmra.mxu0 %v489
        %v517 = vpop.f32.mrf.mxu0
        %v518 = vadd.f32 %v470, %v517
        %519 = vmatmul.f32.gmra.mxu0 %v492
        %v520 = vpop.f32.mrf.mxu0
        %v521 = vadd.f32 %v475, %v520
        %522 = vmatmul.f32.gmra.mxu0 %v495
        %v523 = vpop.f32.mrf.mxu0
        %v524 = vadd.f32 %v480, %v523
        %525 = vmatmul.f32.gmra.mxu0 %v498
        %v526 = vpop.f32.mrf.mxu0
        %v527 = vadd.f32 %v485, %v526
        %528 = vdwg.mxu0
        %529 = vmatpush.msra.mxu0 0.0
        %530 = vmatpush.msra.mxu0 0.0
        %531 = vmatpush.msra.mxu0 0.0
        %532 = vmatpush.msra.mxu0 0.0
        %533 = vmatpush.msra.mxu0 0.0
        %534 = vmatpush.msra.mxu0 0.0
        %535 = vmatpush.msra.mxu0 0.0
        %536 = vmatpush.msra.mxu0 0.0
        %537 = vmatpush.msra.mxu0 0.0
        %538 = vmatpush.msra.mxu0 0.0
        %539 = vmatpush.msra.mxu0 0.0
        %540 = vmatpush.msra.mxu0 0.0
        %541 = vmatpush.msra.mxu0 %v462
        %542 = vmatpush.msra.mxu0 %v460
        %543 = vmatpush.msra.mxu0 %v458
        %544 = vmatpush.msra.mxu0 %v456
        %545 = vmatmul.f32.gmra.mxu0 %v489
        %v546 = vpop.f32.mrf.mxu0
        %v547 = vadd.f32 %v470, %v546
        %548 = vmatmul.f32.gmra.mxu0 %v492
        %v549 = vpop.f32.mrf.mxu0
        %v550 = vadd.f32 %v475, %v549
        %551 = vmatmul.f32.gmra.mxu0 %v495
        %v552 = vpop.f32.mrf.mxu0
        %v553 = vadd.f32 %v480, %v552
        %554 = vmatmul.f32.gmra.mxu0 %v498
        %v555 = vpop.f32.mrf.mxu0
        %v556 = vadd.f32 %v485, %v555
        %557 = vdwg.mxu0
        %v558 = vmax.f32 %v518, 0.0
        %v559 = vmax.f32 %v547, 0.0
        %v560 = vmax.f32 %v521, 0.0
        %v561 = vmax.f32 %v550, 0.0
        %v562 = vmax.f32 %v524, 0.0
        %v563 = vmax.f32 %v553, 0.0
        %v564 = vmax.f32 %v527, 0.0
        %v565 = vmax.f32 %v556, 0.0
        %v566 = vld [vmem:[#allocation2] sm:$0xff]
        %v567 = vld [vmem:[#allocation2 + $0x8] sm:$0xff]
        %v568 = vld [vmem:[#allocation2 + $0x10] sm:$0xff]
        %v569 = vld [vmem:[#allocation2 + $0x18] sm:$0xff]
        %v570 = vadd.f32 %v566, %v558
        %v571 = vadd.f32 %v567, %v560
        %v572 = vadd.f32 %v568, %v562
        %v573 = vadd.f32 %v569, %v564
        %574 = vst [vmem:[#allocation2] sm:$0xff] %v570
        %575 = vst [vmem:[#allocation2 + $0x8] sm:$0xff] %v571
        %576 = vst [vmem:[#allocation2 + $0x10] sm:$0xff] %v572
        %577 = vst [vmem:[#allocation2 + $0x18] sm:$0xff] %v573
        %v578 = vld [vmem:[#allocation2] sm:$0xff]
        %v579 = vld [vmem:[#allocation2 + $0x8] sm:$0xff]
        %v580 = vld [vmem:[#allocation2 + $0x10] sm:$0xff]
        %v581 = vld [vmem:[#allocation2 + $0x18] sm:$0xff]
        %v582 = vadd.f32 %v578, %v559
        %v583 = vadd.f32 %v579, %v561
        %v584 = vadd.f32 %v580, %v563
        %v585 = vadd.f32 %v581, %v565
        %586 = vst [vmem:[#allocation2] sm:$0xff] %v582
        %587 = vst [vmem:[#allocation2 + $0x8] sm:$0xff] %v583
        %588 = vst [vmem:[#allocation2 + $0x10] sm:$0xff] %v584
        %589 = vst [vmem:[#allocation2 + $0x18] sm:$0xff] %v585
        // Predicated region
        $region65: #{critic_head_forward.1} parent=59 // pred_check
          %p590 = pneg %p443
        $region66: #{critic_head_forward.1} parent=59 // pred_check_branch
          %592 = sbr.rel (%p590) target = $region68
        $region67: #{critic_head_forward.1} parent=59 // pred_region
          %v593 = vld [vmem:[#allocation2] sm:$0xff]
          %v594 = vld [vmem:[#allocation2 + $0x8] sm:$0xff]
          %v595 = vld [vmem:[#allocation2 + $0x10] sm:$0xff]
          %v596 = vld [vmem:[#allocation2 + $0x18] sm:$0xff]
          %597 = vadd.xlane.f32.xlu0 %v593
          %v598 = vpop.xlane.xlu0 %597
          %599 = vadd.xlane.f32.xlu0 %v594
          %v600 = vpop.xlane.xlu0 %599
          %601 = vadd.xlane.f32.xlu0 %v595
          %v602 = vpop.xlane.xlu0 %601
          %603 = vadd.xlane.f32.xlu0 %v596
          %v604 = vpop.xlane.xlu0 %603
          %v605 = vmul.f32 %v598, 0.00390625
          %v606 = vmul.f32 %v600, 0.00390625
          %v607 = vmul.f32 %v602, 0.00390625
          %v608 = vmul.f32 %v604, 0.00390625
          %v609 = vld [vmem:[%s3] sm:$0xff]
          %v610 = vld [vmem:[%s3 + $0x8] sm:$0xff]
          %v611 = vld [vmem:[%s3 + $0x10] sm:$0xff]
          %v612 = vld [vmem:[%s3 + $0x18] sm:$0xff]
          %v613 = vmul.f32 %v605, %v609
          %v614 = vmul.f32 %v606, %v610
          %v615 = vmul.f32 %v607, %v611
          %v616 = vmul.f32 %v608, %v612
          %vm617 = vcmask 7168
          %v618 = vsel %vm617, %v613, 0.0
          %v619 = vsel %vm617, %v614, 0.0
          %v620 = vadd.f32 %v618, %v619
          %v621 = vsel %vm617, %v615, 0.0
          %v622 = vadd.f32 %v620, %v621
          %v623 = vsel %vm617, %v616, 0.0
          %v624 = vadd.f32 %v622, %v623
          %v625 = vrot.slane %v624, 4
          %v626 = vadd.f32 %v624, %v625
          %v627 = vrot.slane %v626, 2
          %v628 = vadd.f32 %v626, %v627
          %v629 = vrot.slane %v628, 1
          %v630 = vadd.f32 %v628, %v629
          %s631 = sld [smem:[#allocation3]]
          %v632 = vstv %s631
          %v633 = vadd.f32 %v630, %v632
          %635 = vset.pattern.permute.xlu0 0
          %636 = vperm.xlu0 %635, %v633
          %v637 = vpop.permute.xlu0 %636
          %639 = vst [vmem:[%s442] sm:$0x1] %v637
          %v640 = vld [vmem:[%s6] sm:$0xff]
          %v641 = vld [vmem:[%s6 + $0x8] sm:$0xff]
          %v642 = vld [vmem:[%s6 + $0x10] sm:$0xff]
          %v643 = vld [vmem:[%s6 + $0x18] sm:$0xff]
          %v644 = vld [vmem:[%s439] sm:$0xff]
          %v645 = vld [vmem:[%s439 + $0x8] sm:$0xff]
          %v646 = vld [vmem:[%s439 + $0x10] sm:$0xff]
          %v647 = vld [vmem:[%s439 + $0x18] sm:$0xff]
          %v648 = vld [vmem:[%s439 + $0x20] sm:$0xff]
          %v649 = vld [vmem:[%s7] sm:$0xff]
          %v650 = vld [vmem:[%s7 + $0x8] sm:$0xff]
          %v651 = vld [vmem:[%s7 + $0x10] sm:$0xff]
          %v652 = vld [vmem:[%s7 + $0x18] sm:$0xff]
          %654 = vset.pattern.permute.xlu0 0
          %655 = vperm.xlu0 %654, %v649
          %v656 = vpop.permute.xlu0 %655
          %659 = vset.pattern.permute.xlu0 0
          %660 = vperm.xlu0 %659, %v650
          %v661 = vpop.permute.xlu0 %660
          %664 = vset.pattern.permute.xlu0 0
          %665 = vperm.xlu0 %664, %v651
          %v666 = vpop.permute.xlu0 %665
          %669 = vset.pattern.permute.xlu0 0
          %670 = vperm.xlu0 %669, %v652
          %v671 = vpop.permute.xlu0 %670
          %vm673 = vcmask 326656
          %v675 = vsel %vm673, %v640, 0
          %v678 = vsel %vm673, %v641, 0
          %v681 = vsel %vm673, %v642, 0
          %v684 = vsel %vm673, %v643, 0
          %686 = vmatpush.msra.mxu0 0.0
          %687 = vmatpush.msra.mxu0 0.0
          %688 = vmatpush.msra.mxu0 0.0
          %689 = vmatpush.msra.mxu0 0.0
          %690 = vmatpush.msra.mxu0 0.0
          %691 = vmatpush.msra.mxu0 0.0
          %692 = vmatpush.msra.mxu0 0.0
          %693 = vmatpush.msra.mxu0 0.0
          %694 = vmatpush.msra.mxu0 0.0
          %695 = vmatpush.msra.mxu0 0.0
          %696 = vmatpush.msra.mxu0 0.0
          %697 = vmatpush.msra.mxu0 %v648
          %698 = vmatpush.msra.mxu0 %v647
          %699 = vmatpush.msra.mxu0 %v646
          %700 = vmatpush.msra.mxu0 %v645
          %701 = vmatpush.msra.mxu0 %v644
          %702 = vmatmul.f32.gmra.mxu0 %v675
          %v703 = vpop.f32.mrf.mxu0
          %v704 = vadd.f32 %v656, %v703
          %705 = vmatmul.f32.gmra.mxu0 %v678
          %v706 = vpop.f32.mrf.mxu0
          %v707 = vadd.f32 %v661, %v706
          %708 = vmatmul.f32.gmra.mxu0 %v681
          %v709 = vpop.f32.mrf.mxu0
          %v710 = vadd.f32 %v666, %v709
          %711 = vmatmul.f32.gmra.mxu0 %v684
          %v712 = vpop.f32.mrf.mxu0
          %v713 = vadd.f32 %v671, %v712
          %714 = vdwg.mxu0
          %v715 = vmax.f32 %v704, 0.0
          %v716 = vmax.f32 %v707, 0.0
          %v717 = vmax.f32 %v710, 0.0
          %v718 = vmax.f32 %v713, 0.0
          %v719 = vld [vmem:[%s8] sm:$0xff]
          %v720 = vld [vmem:[%s8 + $0x8] sm:$0xff]
          %v721 = vld [vmem:[%s8 + $0x10] sm:$0xff]
          %v722 = vld [vmem:[%s8 + $0x18] sm:$0xff]
          %724 = vset.pattern.permute.xlu0 0
          %725 = vperm.xlu0 %724, %v719
          %v726 = vpop.permute.xlu0 %725
          %729 = vset.pattern.permute.xlu0 0
          %730 = vperm.xlu0 %729, %v720
          %v731 = vpop.permute.xlu0 %730
          %734 = vset.pattern.permute.xlu0 0
          %735 = vperm.xlu0 %734, %v721
          %v736 = vpop.permute.xlu0 %735
          %739 = vset.pattern.permute.xlu0 0
          %740 = vperm.xlu0 %739, %v722
          %v741 = vpop.permute.xlu0 %740
          %v743 = vmul.f32 %v715, %v726
          %v744 = vmul.f32 %v716, %v731
          %v745 = vmul.f32 %v717, %v736
          %v746 = vmul.f32 %v718, %v741
          %v747 = vadd.f32 %v743, %v744
          %v748 = vadd.f32 %v747, %v745
          %v749 = vadd.f32 %v748, %v746
          %v750 = vrot.slane %v749, 4
          %v751 = vadd.f32 %v749, %v750
          %v752 = vrot.slane %v751, 2
          %v753 = vadd.f32 %v751, %v752
          %v754 = vrot.slane %v753, 1
          %v755 = vadd.f32 %v753, %v754
          %s756 = sld [smem:[#allocation4]]
          %v757 = vstv %s756
          %v758 = vadd.f32 %v755, %v757
          %759 = vst [vmem:[%s424] sm:$0x1] %v758
        $region68: #{critic_head_forward.1} parent=59 // pred_fallthru
          _
        %p760 = scmp.lt.s32.totalorder %s32, 1
        %s761 = scalar_select %p760, %s32, 1
        %s762 = scalar_lea.vmem %s10, %s761
        %s763 = sand.u32 %s296, 1
        %s764 = scalar_lea.sflag [#allocation6], %s763
        %s765 = sand.u32 %s296, 1
        %s766 = scalar_lea.vmem [#allocation5], %s765
        // Predicated region
        $region69: #{critic_head_forward.1} parent=59 // pred_check
          %p767 = pneg %p280
        $region70: #{critic_head_forward.1} parent=59 // pred_check_branch
          %769 = sbr.rel (%p767) target = $region72
        $region71: #{critic_head_forward.1} parent=59 // pred_region
          _
        $region72: #{critic_head_forward.1} parent=59 // pred_fallthru
          _
        // Predicated region
        $region73: #{critic_head_forward.1} parent=59 // pred_check
          %p770 = pneg %p306
        $region74: #{critic_head_forward.1} parent=59 // pred_check_branch
          %772 = sbr.rel (%p770) target = $region76
        $region75: #{critic_head_forward.1} parent=59 // pred_region
          %774 = vsyncadd %s764, 0
          %s775 = scalar_lea.hbm %s11, %s32
          %s777 = sshll.u32 %s766, 4
          %s778 = int_to_ptr.vmem [resolvable:$true] %s777
          %s779 = sshll.u32 %s775, 4
          %s780 = int_to_ptr.hbm [resolvable:$true] %s779
          %782 = dma.vmem_to_hbm [thread:$0]  %s778, 16, %s780, %s764
        $region76: #{critic_head_forward.1} parent=59 // pred_fallthru
          _
      $region60: #{critic_head_forward.1} parent=5 // pred_fallthru
        _
      %p783 = scmp.le.s32.totalorder 2, %s23
      // Predicated region
      $region77: #{critic_head_forward.1} parent=5 // pred_check
        %p784 = pneg %p783
      $region78: #{critic_head_forward.1} parent=5 // pred_check_branch
        %786 = sbr.rel (%p784) target = $region80
      $region79: #{critic_head_forward.1} parent=5 // pred_region
        %s787 = ssub.s32 %s23, 2
        // Predicated region
        $region81: #{critic_head_forward.1} parent=79 // pred_check
          %p788 = pneg %p286
        $region82: #{critic_head_forward.1} parent=79 // pred_check_branch
          %790 = sbr.rel (%p788) target = $region84
        $region83: #{critic_head_forward.1} parent=79 // pred_region
          %p791 = scmp.lt.s32.totalorder %s34, 1
          %s792 = scalar_select %p791, %s34, 1
          %s793 = scalar_lea.vmem %s10, %s792
        $region84: #{critic_head_forward.1} parent=79 // pred_fallthru
          _
        // Predicated region
        $region85: #{critic_head_forward.1} parent=79 // pred_check
          %p794 = pneg %p312
        $region86: #{critic_head_forward.1} parent=79 // pred_check_branch
          %796 = sbr.rel (%p794) target = $region88
        $region87: #{critic_head_forward.1} parent=79 // pred_region
          %s797 = sand.u32 %s297, 1
          %s798 = scalar_lea.sflag [#allocation6], %s797
          %s799 = sand.u32 %s297, 1
          %s800 = scalar_lea.vmem [#allocation5], %s799
          %802 = dma.done %s798, 16
        $region88: #{critic_head_forward.1} parent=79 // pred_fallthru
          _
      $region80: #{critic_head_forward.1} parent=5 // pred_fallthru
        _
    $region6: #{critic_head_forward.1} parent=1 // loop_footer
      %s27 = sadd.s32 1, %s23
    $region7: #{critic_head_forward.1} parent=1 // loop_footer_branch
      %22 = sbr.rel target = $region3
    $region8: #{critic_head_forward.1} parent=1 // loop_exit
      _
    %803 = vsyncpa [#allocation6], 1
    %s804 = scalar_lea.sflag [#allocation6], 1
    %805 = vsyncpa %s804, 1

</llo_original>
